<compile_context>
chip_gen: v5e
topology: v5e:2x2
jax: 0.10.0
libtpu: 0.0.40
codegen_flags: <defaults>
</compile_context>

<pallas_src>
import jax
import jax.numpy as jnp
from jax.experimental import pallas as pl
from jax.experimental.pallas import tpu as pltpu


def _pick_time_tile(T):
    """Largest multiple-of-128 divisor of T (lane-dense), else the full T."""
    for cand in (2048, 1024, 512, 256, 128):
        if T % cand == 0:
            return cand
    return T


def _make_kernel(C, H, Tt, K, dilation, P, compute_dtype):
    """Per-(batch, time-tile) kernel body on 2-D (channels, time) operands."""

    def kernel(x_ref, halo_ref, we_ref, be_ref, wm_ref, bm_ref, wx_ref,
               bx_ref, alpha_ref, y_ref):
        x = x_ref[...]                                          # (C, Tt)  f32
        we = we_ref[...]                                        # (H, C)   compute_dtype

        # ---- entry 1x1 conv + ReLU (pointwise in time) --------------------
        h = jnp.dot(we, x.astype(compute_dtype),
                    preferred_element_type=jnp.float32)
        h = jnp.maximum(h + be_ref[...], 0.0)                   # (H, Tt)  f32

        # ---- boundary-only reflect pad: stitch the per-tile halo ----------
        if P > 0:
            halo = halo_ref[...].astype(compute_dtype)          # (C, 2P)
            hh = jnp.dot(we, halo, preferred_element_type=jnp.float32)
            hh = jnp.maximum(hh + be_ref[...], 0.0)             # (H, 2P)  f32
            hp = jnp.concatenate([hh[:, :P], h, hh[:, P:]], axis=1)
        else:
            hp = h                                              # (H, Tt + 2P)

        # ---- dilated mid conv: K accumulated MXU matmuls (no im2col) ------
        hp_c = hp.astype(compute_dtype)      # cast ONCE before tap slicing
        wm = wm_ref[...]                     # (K, H, H) compute_dtype
        acc = jnp.dot(wm[0], hp_c[:, 0:Tt], preferred_element_type=jnp.float32)
        for j in range(1, K):
            off = j * dilation
            acc = acc + jnp.dot(wm[j], hp_c[:, off:off + Tt],
                                preferred_element_type=jnp.float32)
        h2 = jnp.maximum(acc + bm_ref[...], 0.0)                # (H, Tt)  f32

        # ---- exit 1x1 conv -------------------------------------------------
        out = jnp.dot(wx_ref[...], h2.astype(compute_dtype),
                      preferred_element_type=jnp.float32)
        out = out + bx_ref[...]                                 # (C, Tt)  f32

        # ---- skip connection + output ReLU; alpha is a scalar in SMEM -----
        alpha = alpha_ref[0]
        y_ref[...] = jnp.maximum(alpha * x + out, 0.0).astype(y_ref.dtype)

    return kernel


def res_block_1d(x, we, be, wm, bm, wx, bx, alpha, *, kwidth, dilation,
                 compute_dtype=jnp.bfloat16, time_tile=None):
    B, C, T = x.shape
    H = we.shape[0]
    K = kwidth
    assert K % 2 == 1, "ResBlock1D skip-add requires odd kwidth"
    P = (K // 2) * dilation
    # Reflect padding is checked against the FULL sequence length.
    assert P <= T - 1, "reflect pad width (kwidth//2)*dilation must be <= T-1"

    Tt = _pick_time_tile(T) if time_tile is None else time_tile
    assert T % Tt == 0, "time_tile must divide T"
    nt = T // Tt

    # Boundary-only reflection, computed wrapper-side on x (entry conv + ReLU
    # are pointwise in time, so entry(reflect_pad(x)) == reflect_pad(entry(x))).
    # Gather a 2P-column halo per (batch, time-tile); interior halos are plain
    # neighbor columns, boundary halos are the reflected edges.
    if P > 0:
        x_p = jnp.pad(x, ((0, 0), (0, 0), (P, P)), mode='reflect')
        t0 = jnp.arange(nt) * Tt
        idx = jnp.concatenate(
            [t0[:, None] + jnp.arange(P)[None, :],              # left halo
             t0[:, None] + Tt + P + jnp.arange(P)[None, :]],    # right halo
            axis=1)                                             # (nt, 2P)
        halos = jnp.transpose(x_p[:, :, idx], (0, 2, 1, 3))     # (B, nt, C, 2P)
    else:
        halos = jnp.zeros((B, nt, C, 1), jnp.float32)           # dummy, ignored
    Wh = halos.shape[-1]

    we_c = we.astype(compute_dtype)                             # (H, C)
    wm_c = jnp.transpose(wm, (2, 0, 1)).astype(compute_dtype)   # (K, H, H): tap-major
    wx_c = wx.astype(compute_dtype)                             # (C, H)
    be2 = be.reshape(H, 1).astype(jnp.float32)
    bm2 = bm.reshape(H, 1).astype(jnp.float32)
    bx2 = bx.reshape(C, 1).astype(jnp.float32)
    alpha1 = alpha.reshape(1).astype(jnp.float32)

    kernel = _make_kernel(C, H, Tt, K, dilation, P, compute_dtype)

    return pl.pallas_call(
        kernel,
        out_shape=jax.ShapeDtypeStruct((B, C, T), jnp.float32),
        grid=(B, nt),
        in_specs=[
            pl.BlockSpec((None, C, Tt), lambda b, t: (b, 0, t)),           # x tile
            pl.BlockSpec((None, None, C, Wh), lambda b, t: (b, t, 0, 0)),  # halo
            pl.BlockSpec((H, C), lambda b, t: (0, 0)),                     # entry W
            pl.BlockSpec((H, 1), lambda b, t: (0, 0)),                     # entry b
            pl.BlockSpec((K, H, H), lambda b, t: (0, 0, 0)),               # mid W
            pl.BlockSpec((H, 1), lambda b, t: (0, 0)),                     # mid b
            pl.BlockSpec((C, H), lambda b, t: (0, 0)),                     # exit W
            pl.BlockSpec((C, 1), lambda b, t: (0, 0)),                     # exit b
            pl.BlockSpec(memory_space=pltpu.MemorySpace.SMEM),             # skip_alpha
        ],
        out_specs=pl.BlockSpec((None, C, Tt), lambda b, t: (b, 0, t)),
        compiler_params=pltpu.CompilerParams(
            dimension_semantics=("parallel", "parallel"),
            vmem_limit_bytes=32 * 1024 * 1024),
    )(x, halos, we_c, be2, wm_c, bm2, wx_c, bx2, alpha1)


def res_block_1d_ref(x, we, be, wm, bm, wx, bx, alpha, *, kwidth, dilation):
    """Pure-JAX reference mirroring the PyTorch forward."""
    B, C, T = x.shape
    H = we.shape[0]
    h = jnp.einsum('hc,bct->bht', we, x) + be[None, :, None]
    h = jnp.maximum(h, 0.0)
    P = (kwidth // 2) * dilation
    hp = jnp.pad(h, ((0, 0), (0, 0), (P, P)), mode='reflect')
    acc = jnp.broadcast_to(bm[None, :, None], (B, H, T))
    for j in range(kwidth):
        off = j * dilation
        acc = acc + jnp.einsum('oi,bit->bot', wm[:, :, j], hp[:, :, off:off + T])
    h2 = jnp.maximum(acc, 0.0)
    out = jnp.einsum('ch,bht->bct', wx, h2) + bx[None, :, None]
    return jnp.maximum(alpha[0] * x + out, 0.0)


if __name__ == "__main__":
    # ResBlock1D(num_inputs=4, hidden_size=8, kwidth=3, dilation=2, bias=True,
    #            norm_type=None); skip_alpha initialized to 0.5
    B, C, T = 2, 4, 16
    H, K, D = 8, 3, 2

    key = jax.random.PRNGKey(0)
    ks = jax.random.split(key, 8)
    x = jax.random.normal(ks[0], (B, C, T), jnp.float32)
    we = jax.random.normal(ks[1], (H, C), jnp.float32) * 0.5     # entry_conv.weight (H,C,1) squeezed
    be = jax.random.normal(ks[2], (H,), jnp.float32) * 0.1       # entry_conv.bias
    wm = jax.random.normal(ks[3], (H, H, K), jnp.float32) * 0.2  # mid_conv.weight
    bm = jax.random.normal(ks[4], (H,), jnp.float32) * 0.1       # mid_conv.bias
    wx = jax.random.normal(ks[5], (C, H), jnp.float32) * 0.3     # exit_conv.weight (C,H,1) squeezed
    bx = jax.random.normal(ks[6], (C,), jnp.float32) * 0.1       # exit_conv.bias
    alpha = jnp.array([0.5], jnp.float32)                        # skip_alpha

    y_ref = res_block_1d_ref(x, we, be, wm, bm, wx, bx, alpha, kwidth=K, dilation=D)

    # f32 path: matches the PyTorch/f32 forward (single time tile at T=16).
    y = res_block_1d(x, we, be, wm, bm, wx, bx, alpha,
                     kwidth=K, dilation=D, compute_dtype=jnp.float32)
    y = jax.block_until_ready(y)
    assert y.shape == (B, C, T)
    assert jnp.allclose(y, y_ref, atol=1e-3, rtol=1e-3), "f32 kernel/reference mismatch"

    # Default bf16-operand path (MXU-native on v6e/v7x, f32 accumulation).
    y_bf = res_block_1d(x, we, be, wm, bm, wx, bx, alpha, kwidth=K, dilation=D)
    y_bf = jax.block_until_ready(y_bf)
    assert jnp.allclose(y_bf, y_ref, atol=1e-1, rtol=1e-1), "bf16 kernel drifted too far"

    # Lane-dense multi-tile path: T=1024, T_tile=256 -> 4 tiles per sequence,
    # per-tile halos (interior neighbors + reflected boundaries) exercised.
    T2 = 1024
    x2 = jax.random.normal(ks[7], (B, C, T2), jnp.float32)
    y2_ref = res_block_1d_ref(x2, we, be, wm, bm, wx, bx, alpha, kwidth=K, dilation=D)
    y2 = res_block_1d(x2, we, be, wm, bm, wx, bx, alpha,
                      kwidth=K, dilation=D, compute_dtype=jnp.float32, time_tile=256)
    y2 = jax.block_until_ready(y2)
    assert y2.shape == (B, C, T2)
    assert jnp.allclose(y2, y2_ref, atol=1e-3, rtol=1e-3), "tiled kernel/reference mismatch"

    print("KERNEL_OK")
</pallas_src>

<mosaic_0001>
module attributes {stable_mosaic.version = 11 : i64} {
  func.func @kernel(%arg0: i32, %arg1: i32, %arg2: memref<1x4x16xf32, #tpu.memory_space<vmem>>, %arg3: memref<1x1x4x4xf32, #tpu.memory_space<vmem>>, %arg4: memref<8x4xf32, #tpu.memory_space<vmem>>, %arg5: memref<8x1xf32, #tpu.memory_space<vmem>>, %arg6: memref<3x8x8xf32, #tpu.memory_space<vmem>>, %arg7: memref<8x1xf32, #tpu.memory_space<vmem>>, %arg8: memref<4x8xf32, #tpu.memory_space<vmem>>, %arg9: memref<4x1xf32, #tpu.memory_space<vmem>>, %arg10: memref<1xf32, #tpu.memory_space<smem>>, %arg11: memref<1x4x16xf32, #tpu.memory_space<vmem>>) attributes {dimension_semantics = [#tpu.dimension_semantics<parallel>, #tpu.dimension_semantics<parallel>], iteration_bounds = array<i64: 2, 1>, scalar_prefetch = 0 : i64, scratch_operands = 0 : i64, tpu.core_type = #tpu.core_type<tc>, window_params = [{transform_indices = @transform_0, window_bounds = array<i64: 1, 4, 16>}, {transform_indices = @transform_1, window_bounds = array<i64: 1, 1, 4, 4>}, {pipeline_mode = #tpu.pipeline_mode<synchronous>, transform_indices = @transform_2, window_bounds = array<i64: 8, 4>}, {pipeline_mode = #tpu.pipeline_mode<synchronous>, transform_indices = @transform_3, window_bounds = array<i64: 8, 1>}, {pipeline_mode = #tpu.pipeline_mode<synchronous>, transform_indices = @transform_4, window_bounds = array<i64: 3, 8, 8>}, {pipeline_mode = #tpu.pipeline_mode<synchronous>, transform_indices = @transform_5, window_bounds = array<i64: 8, 1>}, {pipeline_mode = #tpu.pipeline_mode<synchronous>, transform_indices = @transform_6, window_bounds = array<i64: 4, 8>}, {pipeline_mode = #tpu.pipeline_mode<synchronous>, transform_indices = @transform_7, window_bounds = array<i64: 4, 1>}, {transform_indices = @transform_8, window_bounds = array<i64: 1>}, {transform_indices = @transform_9, window_bounds = array<i64: 1, 4, 16>}]} {
    %c0 = arith.constant 0 : index
    %c0_0 = arith.constant 0 : index
    %c0_1 = arith.constant 0 : index
    %0 = vector.load %arg2[%c0, %c0_0, %c0_1] : memref<1x4x16xf32, #tpu.memory_space<vmem>>, vector<1x4x16xf32>
    %1 = vector.shape_cast %0 : vector<1x4x16xf32> to vector<4x16xf32>
    %c0_2 = arith.constant 0 : index
    %c0_3 = arith.constant 0 : index
    %2 = vector.load %arg4[%c0_2, %c0_3] : memref<8x4xf32, #tpu.memory_space<vmem>>, vector<8x4xf32>
    %cst = arith.constant dense<0.000000e+00> : vector<8x16xf32>
    %3 = tpu.matmul %2, %1, %cst {dimension_numbers = #tpu.dot_dimension_numbers<[1], [0], [0], [1], [0, 0, 1, 1], [], []>} : vector<8x4xf32>, vector<4x16xf32>, vector<8x16xf32> -> vector<8x16xf32>
    %c0_4 = arith.constant 0 : index
    %c0_5 = arith.constant 0 : index
    %4 = vector.load %arg5[%c0_4, %c0_5] : memref<8x1xf32, #tpu.memory_space<vmem>>, vector<8x1xf32>
    %5 = vector.broadcast %4 : vector<8x1xf32> to vector<8x16xf32>
    %6 = arith.addf %3, %5 : vector<8x16xf32>
    %cst_6 = arith.constant 0.000000e+00 : f32
    %7 = vector.broadcast %cst_6 : f32 to vector<8x16xf32>
    %8 = arith.maximumf %6, %7 : vector<8x16xf32>
    %c0_7 = arith.constant 0 : index
    %c0_8 = arith.constant 0 : index
    %c0_9 = arith.constant 0 : index
    %c0_10 = arith.constant 0 : index
    %9 = vector.load %arg3[%c0_7, %c0_8, %c0_9, %c0_10] : memref<1x1x4x4xf32, #tpu.memory_space<vmem>>, vector<1x1x4x4xf32>
    %10 = vector.shape_cast %9 : vector<1x1x4x4xf32> to vector<4x4xf32>
    %cst_11 = arith.constant dense<0.000000e+00> : vector<8x4xf32>
    %11 = tpu.matmul %2, %10, %cst_11 {dimension_numbers = #tpu.dot_dimension_numbers<[1], [0], [0], [1], [0, 0, 1, 1], [], []>} : vector<8x4xf32>, vector<4x4xf32>, vector<8x4xf32> -> vector<8x4xf32>
    %c0_12 = arith.constant 0 : index
    %c0_13 = arith.constant 0 : index
    %12 = vector.load %arg5[%c0_12, %c0_13] : memref<8x1xf32, #tpu.memory_space<vmem>>, vector<8x1xf32>
    %13 = vector.broadcast %12 : vector<8x1xf32> to vector<8x4xf32>
    %14 = arith.addf %11, %13 : vector<8x4xf32>
    %cst_14 = arith.constant 0.000000e+00 : f32
    %15 = vector.broadcast %cst_14 : f32 to vector<8x4xf32>
    %16 = arith.maximumf %14, %15 : vector<8x4xf32>
    %17 = vector.extract_strided_slice %16 {offsets = [0, 0], sizes = [8, 2], strides = [1, 1]} : vector<8x4xf32> to vector<8x2xf32>
    %18 = vector.extract_strided_slice %16 {offsets = [0, 2], sizes = [8, 2], strides = [1, 1]} : vector<8x4xf32> to vector<8x2xf32>
    %19 = tpu.concatenate %17, %8, %18 in 1 : vector<8x2xf32>, vector<8x16xf32>, vector<8x2xf32> -> vector<8x20xf32>
    %c0_15 = arith.constant 0 : index
    %c0_16 = arith.constant 0 : index
    %c0_17 = arith.constant 0 : index
    %20 = vector.load %arg6[%c0_15, %c0_16, %c0_17] : memref<3x8x8xf32, #tpu.memory_space<vmem>>, vector<3x8x8xf32>
    %21 = vector.extract_strided_slice %20 {offsets = [0, 0, 0], sizes = [1, 8, 8], strides = [1, 1, 1]} : vector<3x8x8xf32> to vector<1x8x8xf32>
    %22 = vector.shape_cast %21 : vector<1x8x8xf32> to vector<8x8xf32>
    %23 = vector.extract_strided_slice %19 {offsets = [0, 0], sizes = [8, 16], strides = [1, 1]} : vector<8x20xf32> to vector<8x16xf32>
    %cst_18 = arith.constant dense<0.000000e+00> : vector<8x16xf32>
    %24 = tpu.matmul %22, %23, %cst_18 {dimension_numbers = #tpu.dot_dimension_numbers<[1], [0], [0], [1], [0, 0, 1, 1], [], []>} : vector<8x8xf32>, vector<8x16xf32>, vector<8x16xf32> -> vector<8x16xf32>
    %25 = vector.extract_strided_slice %20 {offsets = [1, 0, 0], sizes = [1, 8, 8], strides = [1, 1, 1]} : vector<3x8x8xf32> to vector<1x8x8xf32>
    %26 = vector.shape_cast %25 : vector<1x8x8xf32> to vector<8x8xf32>
    %27 = vector.extract_strided_slice %19 {offsets = [0, 2], sizes = [8, 16], strides = [1, 1]} : vector<8x20xf32> to vector<8x16xf32>
    %cst_19 = arith.constant dense<0.000000e+00> : vector<8x16xf32>
    %28 = tpu.matmul %26, %27, %cst_19 {dimension_numbers = #tpu.dot_dimension_numbers<[1], [0], [0], [1], [0, 0, 1, 1], [], []>} : vector<8x8xf32>, vector<8x16xf32>, vector<8x16xf32> -> vector<8x16xf32>
    %29 = arith.addf %24, %28 : vector<8x16xf32>
    %30 = vector.extract_strided_slice %20 {offsets = [2, 0, 0], sizes = [1, 8, 8], strides = [1, 1, 1]} : vector<3x8x8xf32> to vector<1x8x8xf32>
    %31 = vector.shape_cast %30 : vector<1x8x8xf32> to vector<8x8xf32>
    %32 = vector.extract_strided_slice %19 {offsets = [0, 4], sizes = [8, 16], strides = [1, 1]} : vector<8x20xf32> to vector<8x16xf32>
    %cst_20 = arith.constant dense<0.000000e+00> : vector<8x16xf32>
    %33 = tpu.matmul %31, %32, %cst_20 {dimension_numbers = #tpu.dot_dimension_numbers<[1], [0], [0], [1], [0, 0, 1, 1], [], []>} : vector<8x8xf32>, vector<8x16xf32>, vector<8x16xf32> -> vector<8x16xf32>
    %34 = arith.addf %29, %33 : vector<8x16xf32>
    %c0_21 = arith.constant 0 : index
    %c0_22 = arith.constant 0 : index
    %35 = vector.load %arg7[%c0_21, %c0_22] : memref<8x1xf32, #tpu.memory_space<vmem>>, vector<8x1xf32>
    %36 = vector.broadcast %35 : vector<8x1xf32> to vector<8x16xf32>
    %37 = arith.addf %34, %36 : vector<8x16xf32>
    %cst_23 = arith.constant 0.000000e+00 : f32
    %38 = vector.broadcast %cst_23 : f32 to vector<8x16xf32>
    %39 = arith.maximumf %37, %38 : vector<8x16xf32>
    %c0_24 = arith.constant 0 : index
    %c0_25 = arith.constant 0 : index
    %40 = vector.load %arg8[%c0_24, %c0_25] : memref<4x8xf32, #tpu.memory_space<vmem>>, vector<4x8xf32>
    %cst_26 = arith.constant dense<0.000000e+00> : vector<4x16xf32>
    %41 = tpu.matmul %40, %39, %cst_26 {dimension_numbers = #tpu.dot_dimension_numbers<[1], [0], [0], [1], [0, 0, 1, 1], [], []>} : vector<4x8xf32>, vector<8x16xf32>, vector<4x16xf32> -> vector<4x16xf32>
    %c0_27 = arith.constant 0 : index
    %c0_28 = arith.constant 0 : index
    %42 = vector.load %arg9[%c0_27, %c0_28] : memref<4x1xf32, #tpu.memory_space<vmem>>, vector<4x1xf32>
    %43 = vector.broadcast %42 : vector<4x1xf32> to vector<4x16xf32>
    %44 = arith.addf %41, %43 : vector<4x16xf32>
    %c0_29 = arith.constant 0 : index
    %45 = memref.load %arg10[%c0_29] : memref<1xf32, #tpu.memory_space<smem>>
    %46 = vector.broadcast %45 : f32 to vector<4x16xf32>
    %47 = arith.mulf %46, %1 : vector<4x16xf32>
    %48 = arith.addf %47, %44 : vector<4x16xf32>
    %cst_30 = arith.constant 0.000000e+00 : f32
    %49 = vector.broadcast %cst_30 : f32 to vector<4x16xf32>
    %50 = arith.maximumf %48, %49 : vector<4x16xf32>
    %c0_31 = arith.constant 0 : index
    %c0_32 = arith.constant 0 : index
    %c0_33 = arith.constant 0 : index
    %51 = vector.load %arg11[%c0_31, %c0_32, %c0_33] : memref<1x4x16xf32, #tpu.memory_space<vmem>>, vector<1x4x16xf32>
    %52 = vector.shape_cast %51 : vector<1x4x16xf32> to vector<4x16xf32>
    %53 = vector.shape_cast %50 : vector<4x16xf32> to vector<1x4x16xf32>
    tpu.vector_store %arg11[%c0_31, %c0_32, %c0_33], %53 {strides = array<i32>} : memref<1x4x16xf32, #tpu.memory_space<vmem>>, vector<1x4x16xf32>,
    return
  }
  func.func @transform_0(%arg0: i32, %arg1: i32) -> (i32, i32, i32) {
    %c0_i32 = arith.constant 0 : i32
    %c0_i32_0 = arith.constant 0 : i32
    return %arg0, %c0_i32, %arg1 : i32, i32, i32
  }
  func.func @transform_1(%arg0: i32, %arg1: i32) -> (i32, i32, i32, i32) {
    %c0_i32 = arith.constant 0 : i32
    %c0_i32_0 = arith.constant 0 : i32
    %c0_i32_1 = arith.constant 0 : i32
    return %arg0, %arg1, %c0_i32, %c0_i32_0 : i32, i32, i32, i32
  }
  func.func @transform_2(%arg0: i32, %arg1: i32) -> (i32, i32) {
    %c0_i32 = arith.constant 0 : i32
    %c0_i32_0 = arith.constant 0 : i32
    %c0_i32_1 = arith.constant 0 : i32
    return %c0_i32, %c0_i32_0 : i32, i32
  }
  func.func @transform_3(%arg0: i32, %arg1: i32) -> (i32, i32) {
    %c0_i32 = arith.constant 0 : i32
    %c0_i32_0 = arith.constant 0 : i32
    %c0_i32_1 = arith.constant 0 : i32
    return %c0_i32, %c0_i32_0 : i32, i32
  }
  func.func @transform_4(%arg0: i32, %arg1: i32) -> (i32, i32, i32) {
    %c0_i32 = arith.constant 0 : i32
    %c0_i32_0 = arith.constant 0 : i32
    %c0_i32_1 = arith.constant 0 : i32
    %c0_i32_2 = arith.constant 0 : i32
    return %c0_i32, %c0_i32_0, %c0_i32_1 : i32, i32, i32
  }
  func.func @transform_5(%arg0: i32, %arg1: i32) -> (i32, i32) {
    %c0_i32 = arith.constant 0 : i32
    %c0_i32_0 = arith.constant 0 : i32
    %c0_i32_1 = arith.constant 0 : i32
    return %c0_i32, %c0_i32_0 : i32, i32
  }
  func.func @transform_6(%arg0: i32, %arg1: i32) -> (i32, i32) {
    %c0_i32 = arith.constant 0 : i32
    %c0_i32_0 = arith.constant 0 : i32
    %c0_i32_1 = arith.constant 0 : i32
    return %c0_i32, %c0_i32_0 : i32, i32
  }
  func.func @transform_7(%arg0: i32, %arg1: i32) -> (i32, i32) {
    %c0_i32 = arith.constant 0 : i32
    %c0_i32_0 = arith.constant 0 : i32
    %c0_i32_1 = arith.constant 0 : i32
    return %c0_i32, %c0_i32_0 : i32, i32
  }
  func.func @transform_8(%arg0: i32, %arg1: i32) -> i32 {
    %c0_i32 = arith.constant 0 : i32
    %c0_i32_0 = arith.constant 0 : i32
    return %c0_i32 : i32
  }
  func.func @transform_9(%arg0: i32, %arg1: i32) -> (i32, i32, i32) {
    %c0_i32 = arith.constant 0 : i32
    %c0_i32_0 = arith.constant 0 : i32
    return %arg0, %c0_i32, %arg1 : i32, i32, i32
  }
}

</mosaic_0001>

<llo_original>
// kernel: tpu_custom_call.1
$region0: #{tpu_custom_call.1}
  #allocation0 [shape = 'u32[]', space=smem, size = 0x4, offset = 0x4, fixed_abs, tag = 'smem constant byte address 0x4 - core index']
  #allocation1 [shape = 'u32[72,128]{1,0:T(1,128)}', space=vmem, size = 0x9000, scoped, tag = 'internal scratch']
  #allocation2 [shape = 'f32[1]{0:T(128)S(6)}', space=smem, size = 0x200, scoped, tag = 'scoped memory for tpu_custom_call.1']
  %s0 = inlined_call_operand.vmem [shape: f32[2,4,16], index: 0, kind: input, shape index: {}]
  %s1 = inlined_call_operand.vmem [shape: f32[2,1,4,4], index: 1, kind: input, shape index: {}]
  %s2 = inlined_call_operand.vmem [shape: f32[8,4], index: 2, kind: input, shape index: {}]
  %s3 = inlined_call_operand.vmem [shape: f32[8,1], index: 3, kind: input, shape index: {}]
  %s4 = inlined_call_operand.hbm [shape: f32[3,8,8], index: 4, kind: input, shape index: {}]
  %s5 = inlined_call_operand.vmem [shape: f32[8,1], index: 5, kind: input, shape index: {}]
  %s6 = inlined_call_operand.vmem [shape: f32[4,8], index: 6, kind: input, shape index: {}]
  %s7 = inlined_call_operand.vmem [shape: f32[4,1], index: 7, kind: input, shape index: {}]
  %s8 = inlined_call_operand.<no memory space> [shape: f32[1], index: 8, kind: input, shape index: {}]
  %s9 = inlined_call_operand.hbm [shape: f32[2,4,16], index: 9, kind: output, shape index: {}]
  %s10 = sld [smem:[#allocation0]]
  $region73: #{tpu_custom_call.1} parent=0
    _
  %s12 = ssub.s32 1, %s10
  %s13 = scalar_select 0, %s12, %s10
  %14 = sst [smem:[#allocation2]] %s8
  $region1: #{tpu_custom_call.1} parent=0
    #allocation3 [shape = 'u8[12288]{0}', space=vmem, size = 0x3000, scoped, tag = 'input window, operand 4, single buffered']
    #allocation4 [shape = 's32[2]{0}', space=sflag, size = 0x8, scoped, tag = 'scoped memory for tpu_custom_call.1']
    #allocation5 [shape = 's32[2]{0}', space=sflag, size = 0x8, scoped, tag = 'scoped memory for tpu_custom_call.1']
    #allocation6 [shape = 'u8[4096]{0}', space=vmem, size = 0x1000, scoped, tag = 'output window, operand 0']
    %15 = vsyncpa [#allocation4], 0
    %16 = vsyncpa [#allocation5], 0
    %s17 = scalar_lea.sflag [#allocation5], 1
    %18 = vsyncpa %s17, 0
    loop: start=0, step=1, limit=4
    $region2: #{tpu_custom_call.1} parent=1 // loop_pre_header
      _
    $region3: #{tpu_custom_call.1} parent=1 // loop_header
      %s20 = sphi 0, %s24
      %p21 = scmp.ge.s32.totalorder %s20, 4
      %s27 = sphi 0, %s39
      %s28 = sphi 0, %s35
      %s29 = sphi 0, %s27
      %s30 = sphi 0, %s28
      %s31 = sphi 0, %s29
      %s32 = sphi 0, %s30
      %s44 = sphi 0, %s46
      %s47 = sphi 0, %s44
      %s48 = sphi 0, %s47
      %s64 = sphi 0, %s48
      %s72 = sphi 0, %s74
      %s75 = sphi 0, %s72
      %s76 = sphi 0, %s75
      %s92 = sphi 0, %s76
      %s96 = sphi 0, %s96
      %s98 = sphi 0, %s96
      %s99 = sphi 0, %s98
      %s113 = sphi 0, %s99
      %s117 = sphi 0, %s117
      %s119 = sphi 0, %s117
      %s120 = sphi 0, %s119
      %s134 = sphi 0, %s120
      %s138 = sphi 0, %s138
      %s140 = sphi 0, %s138
      %s141 = sphi 0, %s140
      %s155 = sphi 0, %s141
      %s159 = sphi 0, %s159
      %s161 = sphi 0, %s159
      %s162 = sphi 0, %s161
      %s176 = sphi 0, %s162
      %s180 = sphi 0, %s180
      %s182 = sphi 0, %s180
      %s183 = sphi 0, %s182
      %s197 = sphi 0, %s183
      %s201 = sphi 0, %s201
      %s203 = sphi 0, %s201
      %s204 = sphi 0, %s203
      %s218 = sphi 0, %s204
      %s222 = sphi 0, %s222
      %s224 = sphi 0, %s222
      %s225 = sphi 0, %s224
      %s239 = sphi 0, %s225
      %s247 = sphi 0, %s249
      %s250 = sphi 0, %s247
      %s251 = sphi 0, %s250
      %s267 = sphi 0, %s251
    $region4: #{tpu_custom_call.1} parent=1 // loop_header_branch
      %23 = sbr.rel (%p21) target = $region8
    $region5: #{tpu_custom_call.1} parent=1 // loop_body
      %s25 = ssub.s32 %s20, 1
      %s26 = ssub.s32 %s20, 2
      %s33 = sadd.s32 1, %s28
      %p34 = scmp.ge.s32.totalorder %s33, 1
      %s35 = scalar_select %p34, 0, %s33
      %s36 = sadd.s32 1, %s27
      %s37 = scalar_select %p34, %s36, %s27
      %p38 = scmp.ge.s32.totalorder %s37, 2
      %s39 = scalar_select %p38, 0, %s37
      %s40 = ssub.s32 %s27, %s39
      %s41 = ssub.s32 %s28, %s35
      %s42 = sor.u32 %s40, %s41
      %p43 = scmp.eq.s32.totalorder %s42, 0
      %s45 = sadd.s32 %s44, 1
      %s46 = scalar_select %p43, %s44, %s45
      %p49 = pneg %p43
      %p50 = scmp.eq.s32.totalorder %s20, 1
      %p51 = por %p49, %p50
      %p52 = scmp.ne.s32.totalorder %s44, %s47
      %p53 = scmp.eq.s32.totalorder %s20, 0
      %p54 = por %p52, %p53
      %p55 = scmp.ne.s32.totalorder %s44, %s47
      %p56 = scmp.eq.s32.totalorder %s25, 1
      %p57 = por %p55, %p56
      %p58 = scmp.ne.s32.totalorder %s47, %s48
      %p59 = scmp.eq.s32.totalorder %s25, 0
      %p60 = por %p58, %p59
      %p61 = scmp.ne.s32.totalorder %s47, %s48
      %p62 = scmp.eq.s32.totalorder %s26, 1
      %p63 = por %p61, %p62
      %p65 = scmp.ne.s32.totalorder %s48, %s64
      %p66 = scmp.eq.s32.totalorder %s26, 0
      %p67 = por %p65, %p66
      %s68 = ssub.s32 %s27, %s39
      %s69 = ssub.s32 %s28, %s35
      %s70 = sor.u32 %s68, %s69
      %p71 = scmp.eq.s32.totalorder %s70, 0
      %s73 = sadd.s32 %s72, 1
      %s74 = scalar_select %p71, %s72, %s73
      %p77 = pneg %p71
      %p78 = scmp.eq.s32.totalorder %s20, 1
      %p79 = por %p77, %p78
      %p80 = scmp.ne.s32.totalorder %s72, %s75
      %p81 = scmp.eq.s32.totalorder %s20, 0
      %p82 = por %p80, %p81
      %p83 = scmp.ne.s32.totalorder %s72, %s75
      %p84 = scmp.eq.s32.totalorder %s25, 1
      %p85 = por %p83, %p84
      %p86 = scmp.ne.s32.totalorder %s75, %s76
      %p87 = scmp.eq.s32.totalorder %s25, 0
      %p88 = por %p86, %p87
      %p89 = scmp.ne.s32.totalorder %s75, %s76
      %p90 = scmp.eq.s32.totalorder %s26, 1
      %p91 = por %p89, %p90
      %p93 = scmp.ne.s32.totalorder %s76, %s92
      %p94 = scmp.eq.s32.totalorder %s26, 0
      %p95 = por %p93, %p94
      %s97 = sadd.s32 %s96, 1
      %p100 = scmp.eq.s32.totalorder %s20, 1
      %p101 = scmp.ne.s32.totalorder %s96, %s98
      %p102 = scmp.eq.s32.totalorder %s20, 0
      %p103 = por %p101, %p102
      %p104 = scmp.ne.s32.totalorder %s96, %s98
      %p105 = scmp.eq.s32.totalorder %s25, 1
      %p106 = por %p104, %p105
      %p107 = scmp.ne.s32.totalorder %s98, %s99
      %p108 = scmp.eq.s32.totalorder %s25, 0
      %p109 = por %p107, %p108
      %p110 = scmp.ne.s32.totalorder %s98, %s99
      %p111 = scmp.eq.s32.totalorder %s26, 1
      %p112 = por %p110, %p111
      %p114 = scmp.ne.s32.totalorder %s99, %s113
      %p115 = scmp.eq.s32.totalorder %s26, 0
      %p116 = por %p114, %p115
      %s118 = sadd.s32 %s117, 1
      %p121 = scmp.eq.s32.totalorder %s20, 1
      %p122 = scmp.ne.s32.totalorder %s117, %s119
      %p123 = scmp.eq.s32.totalorder %s20, 0
      %p124 = por %p122, %p123
      %p125 = scmp.ne.s32.totalorder %s117, %s119
      %p126 = scmp.eq.s32.totalorder %s25, 1
      %p127 = por %p125, %p126
      %p128 = scmp.ne.s32.totalorder %s119, %s120
      %p129 = scmp.eq.s32.totalorder %s25, 0
      %p130 = por %p128, %p129
      %p131 = scmp.ne.s32.totalorder %s119, %s120
      %p132 = scmp.eq.s32.totalorder %s26, 1
      %p133 = por %p131, %p132
      %p135 = scmp.ne.s32.totalorder %s120, %s134
      %p136 = scmp.eq.s32.totalorder %s26, 0
      %p137 = por %p135, %p136
      %s139 = sadd.s32 %s138, 1
      %p142 = scmp.eq.s32.totalorder %s20, 1
      %p143 = scmp.ne.s32.totalorder %s138, %s140
      %p144 = scmp.eq.s32.totalorder %s20, 0
      %p145 = por %p143, %p144
      %p146 = scmp.ne.s32.totalorder %s138, %s140
      %p147 = scmp.eq.s32.totalorder %s25, 1
      %p148 = por %p146, %p147
      %p149 = scmp.ne.s32.totalorder %s140, %s141
      %p150 = scmp.eq.s32.totalorder %s25, 0
      %p151 = por %p149, %p150
      %p152 = scmp.ne.s32.totalorder %s140, %s141
      %p153 = scmp.eq.s32.totalorder %s26, 1
      %p154 = por %p152, %p153
      %p156 = scmp.ne.s32.totalorder %s141, %s155
      %p157 = scmp.eq.s32.totalorder %s26, 0
      %p158 = por %p156, %p157
      %s160 = sadd.s32 %s159, 1
      %p163 = scmp.eq.s32.totalorder %s20, 1
      %p164 = scmp.ne.s32.totalorder %s159, %s161
      %p165 = scmp.eq.s32.totalorder %s20, 0
      %p166 = por %p164, %p165
      %p167 = scmp.ne.s32.totalorder %s159, %s161
      %p168 = scmp.eq.s32.totalorder %s25, 1
      %p169 = por %p167, %p168
      %p170 = scmp.ne.s32.totalorder %s161, %s162
      %p171 = scmp.eq.s32.totalorder %s25, 0
      %p172 = por %p170, %p171
      %p173 = scmp.ne.s32.totalorder %s161, %s162
      %p174 = scmp.eq.s32.totalorder %s26, 1
      %p175 = por %p173, %p174
      %p177 = scmp.ne.s32.totalorder %s162, %s176
      %p178 = scmp.eq.s32.totalorder %s26, 0
      %p179 = por %p177, %p178
      %s181 = sadd.s32 %s180, 1
      %p184 = scmp.eq.s32.totalorder %s20, 1
      %p185 = scmp.ne.s32.totalorder %s180, %s182
      %p186 = scmp.eq.s32.totalorder %s20, 0
      %p187 = por %p185, %p186
      %p188 = scmp.ne.s32.totalorder %s180, %s182
      %p189 = scmp.eq.s32.totalorder %s25, 1
      %p190 = por %p188, %p189
      %p191 = scmp.ne.s32.totalorder %s182, %s183
      %p192 = scmp.eq.s32.totalorder %s25, 0
      %p193 = por %p191, %p192
      %p194 = scmp.ne.s32.totalorder %s182, %s183
      %p195 = scmp.eq.s32.totalorder %s26, 1
      %p196 = por %p194, %p195
      %p198 = scmp.ne.s32.totalorder %s183, %s197
      %p199 = scmp.eq.s32.totalorder %s26, 0
      %p200 = por %p198, %p199
      %s202 = sadd.s32 %s201, 1
      %p205 = scmp.eq.s32.totalorder %s20, 1
      %p206 = scmp.ne.s32.totalorder %s201, %s203
      %p207 = scmp.eq.s32.totalorder %s20, 0
      %p208 = por %p206, %p207
      %p209 = scmp.ne.s32.totalorder %s201, %s203
      %p210 = scmp.eq.s32.totalorder %s25, 1
      %p211 = por %p209, %p210
      %p212 = scmp.ne.s32.totalorder %s203, %s204
      %p213 = scmp.eq.s32.totalorder %s25, 0
      %p214 = por %p212, %p213
      %p215 = scmp.ne.s32.totalorder %s203, %s204
      %p216 = scmp.eq.s32.totalorder %s26, 1
      %p217 = por %p215, %p216
      %p219 = scmp.ne.s32.totalorder %s204, %s218
      %p220 = scmp.eq.s32.totalorder %s26, 0
      %p221 = por %p219, %p220
      %s223 = sadd.s32 %s222, 1
      %p226 = scmp.eq.s32.totalorder %s20, 1
      %p227 = scmp.ne.s32.totalorder %s222, %s224
      %p228 = scmp.eq.s32.totalorder %s20, 0
      %p229 = por %p227, %p228
      %p230 = scmp.ne.s32.totalorder %s222, %s224
      %p231 = scmp.eq.s32.totalorder %s25, 1
      %p232 = por %p230, %p231
      %p233 = scmp.ne.s32.totalorder %s224, %s225
      %p234 = scmp.eq.s32.totalorder %s25, 0
      %p235 = por %p233, %p234
      %p236 = scmp.ne.s32.totalorder %s224, %s225
      %p237 = scmp.eq.s32.totalorder %s26, 1
      %p238 = por %p236, %p237
      %p240 = scmp.ne.s32.totalorder %s225, %s239
      %p241 = scmp.eq.s32.totalorder %s26, 0
      %p242 = por %p240, %p241
      %s243 = ssub.s32 %s27, %s39
      %s244 = ssub.s32 %s28, %s35
      %s245 = sor.u32 %s243, %s244
      %p246 = scmp.eq.s32.totalorder %s245, 0
      %s248 = sadd.s32 %s247, 1
      %s249 = scalar_select %p246, %s247, %s248
      %p252 = pneg %p246
      %p253 = scmp.eq.s32.totalorder %s20, 1
      %p254 = por %p252, %p253
      %p255 = scmp.ne.s32.totalorder %s247, %s250
      %p256 = scmp.eq.s32.totalorder %s20, 0
      %p257 = por %p255, %p256
      %p258 = scmp.ne.s32.totalorder %s247, %s250
      %p259 = scmp.eq.s32.totalorder %s25, 1
      %p260 = por %p258, %p259
      %p261 = scmp.ne.s32.totalorder %s250, %s251
      %p262 = scmp.eq.s32.totalorder %s25, 0
      %p263 = por %p261, %p262
      %p264 = scmp.ne.s32.totalorder %s250, %s251
      %p265 = scmp.eq.s32.totalorder %s26, 1
      %p266 = por %p264, %p265
      %p268 = scmp.ne.s32.totalorder %s251, %s267
      %p269 = scmp.eq.s32.totalorder %s26, 0
      %p270 = por %p268, %p269
      %p271 = scmp.le.s32.totalorder 1, %s20
      %p272 = scmp.lt.s32.totalorder %s20, 3
      %p273 = pnand %p271, %p272
      %p274 = pneg %p273
      // Predicated region
      $region9: #{tpu_custom_call.1} parent=5 // pred_check
        _
      $region10: #{tpu_custom_call.1} parent=5 // pred_check_branch
        %276 = sbr.rel (%p273) target = $region12
      $region11: #{tpu_custom_call.1} parent=5 // pred_region
        %s277 = ssub.s32 %s20, 1
        // Predicated region
        $region13: #{tpu_custom_call.1} parent=11 // pred_check
          %p278 = pneg %p109
        $region14: #{tpu_custom_call.1} parent=11 // pred_check_branch
          %280 = sbr.rel (%p278) target = $region16
        $region15: #{tpu_custom_call.1} parent=11 // pred_region
          _
        $region16: #{tpu_custom_call.1} parent=11 // pred_fallthru
          _
        // Predicated region
        $region17: #{tpu_custom_call.1} parent=11 // pred_check
          %p281 = pneg %p130
        $region18: #{tpu_custom_call.1} parent=11 // pred_check_branch
          %283 = sbr.rel (%p281) target = $region20
        $region19: #{tpu_custom_call.1} parent=11 // pred_region
          _
        $region20: #{tpu_custom_call.1} parent=11 // pred_fallthru
          _
        // Predicated region
        $region21: #{tpu_custom_call.1} parent=11 // pred_check
          %p284 = pneg %p151
        $region22: #{tpu_custom_call.1} parent=11 // pred_check_branch
          %286 = sbr.rel (%p284) target = $region24
        $region23: #{tpu_custom_call.1} parent=11 // pred_region
          %288 = vsyncadd [#allocation4], 0
          %s289 = sshll.u32 %s4, 4
          %s290 = int_to_ptr.hbm [resolvable:$true] %s289
          %s291 = sshll.u32 [#allocation3], 4
          %s292 = int_to_ptr.vmem [resolvable:$true] %s291
          %297 = dma.hbm_to_vmem [thread:$0]  %s290, 384, %s292, [#allocation4], 128, 128, 8
        $region24: #{tpu_custom_call.1} parent=11 // pred_fallthru
          _
        // Predicated region
        $region25: #{tpu_custom_call.1} parent=11 // pred_check
          %p298 = pneg %p172
        $region26: #{tpu_custom_call.1} parent=11 // pred_check_branch
          %300 = sbr.rel (%p298) target = $region28
        $region27: #{tpu_custom_call.1} parent=11 // pred_region
          _
        $region28: #{tpu_custom_call.1} parent=11 // pred_fallthru
          _
        // Predicated region
        $region29: #{tpu_custom_call.1} parent=11 // pred_check
          %p301 = pneg %p193
        $region30: #{tpu_custom_call.1} parent=11 // pred_check_branch
          %303 = sbr.rel (%p301) target = $region32
        $region31: #{tpu_custom_call.1} parent=11 // pred_region
          _
        $region32: #{tpu_custom_call.1} parent=11 // pred_fallthru
          _
        // Predicated region
        $region33: #{tpu_custom_call.1} parent=11 // pred_check
          %p304 = pneg %p214
        $region34: #{tpu_custom_call.1} parent=11 // pred_check_branch
          %306 = sbr.rel (%p304) target = $region36
        $region35: #{tpu_custom_call.1} parent=11 // pred_region
          _
        $region36: #{tpu_custom_call.1} parent=11 // pred_fallthru
          _
        // Predicated region
        $region37: #{tpu_custom_call.1} parent=11 // pred_check
          %p307 = pneg %p235
        $region38: #{tpu_custom_call.1} parent=11 // pred_check_branch
          %309 = sbr.rel (%p307) target = $region40
        $region39: #{tpu_custom_call.1} parent=11 // pred_region
          _
        $region40: #{tpu_custom_call.1} parent=11 // pred_fallthru
          _
      $region12: #{tpu_custom_call.1} parent=5 // pred_fallthru
        _
      %p310 = scmp.lt.s32.totalorder %s20, 2
      // Predicated region
      $region41: #{tpu_custom_call.1} parent=5 // pred_check
        %p311 = pneg %p310
      $region42: #{tpu_custom_call.1} parent=5 // pred_check_branch
        %313 = sbr.rel (%p311) target = $region44
      $region43: #{tpu_custom_call.1} parent=5 // pred_region
        // Predicated region
        $region45: #{tpu_custom_call.1} parent=43 // pred_check
          %p314 = pneg %p54
        $region46: #{tpu_custom_call.1} parent=43 // pred_check_branch
          %316 = sbr.rel (%p314) target = $region48
        $region47: #{tpu_custom_call.1} parent=43 // pred_region
          %p317 = scmp.lt.s32.totalorder %s27, 1
          %s318 = scalar_select %p317, %s27, 1
          %p319 = scmp.lt.s32.totalorder %s28, 0
          %s320 = scalar_select %p319, %s28, 0
          %s321 = sadd.s32 %s320, %s318
          %s322 = smul.addr %s321, 4
          %s323 = scalar_lea.vmem %s0, %s322
        $region48: #{tpu_custom_call.1} parent=43 // pred_fallthru
          _
        // Predicated region
        $region49: #{tpu_custom_call.1} parent=43 // pred_check
          %p324 = pneg %p82
        $region50: #{tpu_custom_call.1} parent=43 // pred_check_branch
          %326 = sbr.rel (%p324) target = $region52
        $region51: #{tpu_custom_call.1} parent=43 // pred_region
          %p327 = scmp.lt.s32.totalorder %s27, 1
          %s328 = scalar_select %p327, %s27, 1
          %p329 = scmp.lt.s32.totalorder %s28, 0
          %s330 = scalar_select %p329, %s28, 0
          %s331 = sadd.s32 %s330, %s328
          %s332 = smul.addr %s331, 4
          %s333 = scalar_lea.vmem %s1, %s332
        $region52: #{tpu_custom_call.1} parent=43 // pred_fallthru
          _
      $region44: #{tpu_custom_call.1} parent=5 // pred_fallthru
        _
      %p334 = scmp.le.s32.totalorder 1, %s20
      %p335 = scmp.lt.s32.totalorder %s20, 3
      %p336 = pnand %p334, %p335
      %p337 = pneg %p336
      // Predicated region
      $region53: #{tpu_custom_call.1} parent=5 // pred_check
        _
      $region54: #{tpu_custom_call.1} parent=5 // pred_check_branch
        %339 = sbr.rel (%p336) target = $region56
      $region55: #{tpu_custom_call.1} parent=5 // pred_region
        %s340 = ssub.s32 %s20, 1
        // Predicated region
        $region57: #{tpu_custom_call.1} parent=55 // pred_check
          %p341 = pneg %p151
        $region58: #{tpu_custom_call.1} parent=55 // pred_check_branch
          %343 = sbr.rel (%p341) target = $region60
        $region59: #{tpu_custom_call.1} parent=55 // pred_region
          %345 = dma.done [#allocation4], 384
        $region60: #{tpu_custom_call.1} parent=55 // pred_fallthru
          _
        %p346 = scmp.lt.s32.totalorder %s29, 1
        %s347 = scalar_select %p346, %s29, 1
        %p348 = scmp.lt.s32.totalorder %s30, 0
        %s349 = scalar_select %p348, %s30, 0
        %s350 = sadd.s32 %s349, %s347
        %s351 = smul.addr %s350, 4
        %s352 = scalar_lea.vmem %s0, %s351
        %p353 = pneg %p60
        %p354 = pneg %p57
        %p355 = scmp.lt.s32.totalorder %s29, 1
        %s356 = scalar_select %p355, %s29, 1
        %p357 = scmp.lt.s32.totalorder %s30, 0
        %s358 = scalar_select %p357, %s30, 0
        %s359 = sadd.s32 %s358, %s356
        %s360 = smul.addr %s359, 4
        %s361 = scalar_lea.vmem %s1, %s360
        %p362 = pneg %p88
        %p363 = pneg %p85
        %p364 = pneg %p109
        %p365 = pneg %p106
        %p366 = pneg %p130
        %p367 = pneg %p127
        %p368 = pneg %p151
        %p369 = pneg %p148
        %p370 = pneg %p172
        %p371 = pneg %p169
        %p372 = pneg %p193
        %p373 = pneg %p190
        %p374 = pneg %p214
        %p375 = pneg %p211
        %p376 = pneg %p235
        %p377 = pneg %p232
        %p378 = pneg %p263
        %p379 = pneg %p260
        %s380 = sand.u32 %s250, 1
        %s381 = scalar_lea.sflag [#allocation5], %s380
        %s382 = sand.u32 %s250, 1
        %s383 = smul.addr %s382, 4
        %s384 = scalar_lea.vmem [#allocation6], %s383
        %p385 = scmp.lt.s32.totalorder %s29, 1
        %s386 = scalar_select %p385, %s29, 1
        %p387 = scmp.lt.s32.totalorder %s30, 0
        %s388 = scalar_select %p387, %s30, 0
        %s389 = sadd.s32 %s388, %s386
        %s390 = smul.addr %s389, 4
        %s391 = scalar_lea.vmem %s0, %s390
        %p392 = scmp.lt.s32.totalorder %s29, 1
        %s393 = scalar_select %p392, %s29, 1
        %p394 = scmp.lt.s32.totalorder %s30, 0
        %s395 = scalar_select %p394, %s30, 0
        %s396 = sadd.s32 %s395, %s393
        %s397 = smul.addr %s396, 4
        %s398 = scalar_lea.vmem %s1, %s397
        %v399 = vld [vmem:[%s391] sm:$0xf]
        %v400 = vld [vmem:[%s2] sm:$0xff]
        %v401 = vld [vmem:[%s3] sm:$0xff]
        %403 = vset.pattern.permute.xlu0 0
        %404 = vperm.xlu0 %403, %v401
        %v405 = vpop.permute.xlu0 %404
        %vm407 = vcmask 31744
        %v409 = vsel %vm407, %v400, 0
        %vm411 = vcmask 1043456
        %v413 = vsel %vm411, %v399, 0
        %415 = vmatpush.msra.mxu0 0.0
        %416 = vmatpush.msra.mxu0 0.0
        %417 = vmatpush.msra.mxu0 0.0
        %418 = vmatpush.msra.mxu0 0.0
        %419 = vmatpush.msra.mxu0 0.0
        %420 = vmatpush.msra.mxu0 0.0
        %421 = vmatpush.msra.mxu0 0.0
        %422 = vmatpush.msra.mxu0 0.0
        %423 = vmatpush.msra.mxu0 0.0
        %424 = vmatpush.msra.mxu0 0.0
        %425 = vmatpush.msra.mxu0 0.0
        %426 = vmatpush.msra.mxu0 0.0
        %427 = vmatpush.msra.mxu0 0.0
        %428 = vmatpush.msra.mxu0 0.0
        %429 = vmatpush.msra.mxu0 0.0
        %430 = vmatpush.msra.mxu0 %v413
        %431 = vmatmul.f32.gmra.mxu0 %v409
        %v432 = vpop.f32.mrf.mxu0
        %v433 = vadd.f32 %v405, %v432
        %434 = vdwg.mxu0
        %v435 = vmax.f32 %v433, 0.0
        %v436 = vld [vmem:[%s398] sm:$0xf]
        %v438 = vsel %vm411, %v436, 0
        %440 = vmatpush.msra.mxu0 0.0
        %441 = vmatpush.msra.mxu0 0.0
        %442 = vmatpush.msra.mxu0 0.0
        %443 = vmatpush.msra.mxu0 0.0
        %444 = vmatpush.msra.mxu0 0.0
        %445 = vmatpush.msra.mxu0 0.0
        %446 = vmatpush.msra.mxu0 0.0
        %447 = vmatpush.msra.mxu0 0.0
        %448 = vmatpush.msra.mxu0 0.0
        %449 = vmatpush.msra.mxu0 0.0
        %450 = vmatpush.msra.mxu0 0.0
        %451 = vmatpush.msra.mxu0 0.0
        %452 = vmatpush.msra.mxu0 0.0
        %453 = vmatpush.msra.mxu0 0.0
        %454 = vmatpush.msra.mxu0 0.0
        %455 = vmatpush.msra.mxu0 %v438
        %456 = vmatmul.f32.gmra.mxu0 %v409
        %v457 = vpop.f32.mrf.mxu0
        %v458 = vadd.f32 %v405, %v457
        %459 = vdwg.mxu0
        %v460 = vmax.f32 %v458, 0.0
        %462 = vrot.lane.b32.xlu0 %v435, 2
        %v463 = vpop.permute.xlu0 %462
        %466 = vrot.lane.b32.xlu0 %v460, 16
        %v467 = vpop.permute.xlu0 %466
        %vm469 = vcmask 15360
        %v470 = vsel %vm469, %v460, %v463
        %vm471 = vcmask 146432
        %v472 = vsel %vm471, %v470, %v467
        %v473 = vld [vmem:[#allocation3] sm:$0xff]
        %v474 = vld [vmem:[#allocation3 + $0x8] sm:$0xff]
        %v475 = vld [vmem:[#allocation3 + $0x10] sm:$0xff]
        %477 = vrot.lane.b32.xlu0 %v472, 126
        %v478 = vpop.permute.xlu0 %477
        %vm480 = vcmask 64512
        %v482 = vsel %vm480, %v474, 0
        %484 = vmatpush.msra.mxu0 0.0
        %485 = vmatpush.msra.mxu0 0.0
        %486 = vmatpush.msra.mxu0 0.0
        %487 = vmatpush.msra.mxu0 0.0
        %488 = vmatpush.msra.mxu0 0.0
        %489 = vmatpush.msra.mxu0 0.0
        %490 = vmatpush.msra.mxu0 0.0
        %491 = vmatpush.msra.mxu0 0.0
        %492 = vmatpush.msra.mxu0 0.0
        %493 = vmatpush.msra.mxu0 0.0
        %494 = vmatpush.msra.mxu0 0.0
        %495 = vmatpush.msra.mxu0 0.0
        %496 = vmatpush.msra.mxu0 0.0
        %497 = vmatpush.msra.mxu0 0.0
        %498 = vmatpush.msra.mxu0 0.0
        %499 = vmatpush.msra.mxu0 %v478
        %500 = vmatmul.f32.gmra.mxu0 %v482
        %v501 = vpop.f32.mrf.mxu0
        %v502 = vadd.f32 0.0, %v501
        %503 = vdwg.mxu0
        %v505 = vsel %vm480, %v473, 0
        %507 = vmatpush.msra.mxu0 0.0
        %508 = vmatpush.msra.mxu0 0.0
        %509 = vmatpush.msra.mxu0 0.0
        %510 = vmatpush.msra.mxu0 0.0
        %511 = vmatpush.msra.mxu0 0.0
        %512 = vmatpush.msra.mxu0 0.0
        %513 = vmatpush.msra.mxu0 0.0
        %514 = vmatpush.msra.mxu0 0.0
        %515 = vmatpush.msra.mxu0 0.0
        %516 = vmatpush.msra.mxu0 0.0
        %517 = vmatpush.msra.mxu0 0.0
        %518 = vmatpush.msra.mxu0 0.0
        %519 = vmatpush.msra.mxu0 0.0
        %520 = vmatpush.msra.mxu0 0.0
        %521 = vmatpush.msra.mxu0 0.0
        %522 = vmatpush.msra.mxu0 %v472
        %523 = vmatmul.f32.gmra.mxu0 %v505
        %v524 = vpop.f32.mrf.mxu0
        %v525 = vadd.f32 %v502, %v524
        %526 = vdwg.mxu0
        %527 = vrot.lane.b32.xlu0 %v472, 124
        %v528 = vpop.permute.xlu0 %527
        %v531 = vsel %vm480, %v475, 0
        %533 = vmatpush.msra.mxu0 0.0
        %534 = vmatpush.msra.mxu0 0.0
        %535 = vmatpush.msra.mxu0 0.0
        %536 = vmatpush.msra.mxu0 0.0
        %537 = vmatpush.msra.mxu0 0.0
        %538 = vmatpush.msra.mxu0 0.0
        %539 = vmatpush.msra.mxu0 0.0
        %540 = vmatpush.msra.mxu0 0.0
        %541 = vmatpush.msra.mxu0 0.0
        %542 = vmatpush.msra.mxu0 0.0
        %543 = vmatpush.msra.mxu0 0.0
        %544 = vmatpush.msra.mxu0 0.0
        %545 = vmatpush.msra.mxu0 0.0
        %546 = vmatpush.msra.mxu0 0.0
        %547 = vmatpush.msra.mxu0 0.0
        %548 = vmatpush.msra.mxu0 %v528
        %549 = vmatmul.f32.gmra.mxu0 %v531
        %v550 = vpop.f32.mrf.mxu0
        %v551 = vadd.f32 0.0, %v550
        %552 = vdwg.mxu0
        %v553 = vadd.f32 %v525, %v551
        %v554 = vld [vmem:[%s5] sm:$0xff]
        %556 = vset.pattern.permute.xlu0 0
        %557 = vperm.xlu0 %556, %v554
        %v558 = vpop.permute.xlu0 %557
        %v560 = vadd.f32 %v553, %v558
        %v561 = vmax.f32 %v560, 0.0
        %v562 = vld [vmem:[%s6] sm:$0xf]
        %v563 = vld [vmem:[%s7] sm:$0xf]
        %565 = vset.pattern.permute.xlu0 0
        %566 = vperm.xlu0 %565, %v563
        %v567 = vpop.permute.xlu0 %566
        %v570 = vsel %vm480, %v562, 0
        %572 = vmatpush.msra.mxu0 0.0
        %573 = vmatpush.msra.mxu0 0.0
        %574 = vmatpush.msra.mxu0 0.0
        %575 = vmatpush.msra.mxu0 0.0
        %576 = vmatpush.msra.mxu0 0.0
        %577 = vmatpush.msra.mxu0 0.0
        %578 = vmatpush.msra.mxu0 0.0
        %579 = vmatpush.msra.mxu0 0.0
        %580 = vmatpush.msra.mxu0 0.0
        %581 = vmatpush.msra.mxu0 0.0
        %582 = vmatpush.msra.mxu0 0.0
        %583 = vmatpush.msra.mxu0 0.0
        %584 = vmatpush.msra.mxu0 0.0
        %585 = vmatpush.msra.mxu0 0.0
        %586 = vmatpush.msra.mxu0 0.0
        %587 = vmatpush.msra.mxu0 %v561
        %588 = vmatmul.f32.gmra.mxu0 %v570
        %v589 = vpop.f32.mrf.mxu0
        %v590 = vadd.f32 %v567, %v589
        %591 = vdwg.mxu0
        %s592 = sld [smem:[#allocation2]]
        %v593 = vstv %s592
        %v594 = vmul.f32 %v593, %v399
        %v595 = vadd.f32 %v594, %v590
        %v596 = vmax.f32 %v595, 0.0
        %vm597 = vcmask 125952
        %598 = vst.msk [vmem:[%s384] sm:$0xf] %vm597, %v596
        %s599 = sand.u32 %s250, 1
        %s600 = scalar_lea.sflag [#allocation5], %s599
        %s601 = sand.u32 %s250, 1
        %s602 = smul.addr %s601, 4
        %s603 = scalar_lea.vmem [#allocation6], %s602
        // Predicated region
        $region61: #{tpu_custom_call.1} parent=55 // pred_check
          %p604 = pneg %p260
        $region62: #{tpu_custom_call.1} parent=55 // pred_check_branch
          %606 = sbr.rel (%p604) target = $region64
        $region63: #{tpu_custom_call.1} parent=55 // pred_region
          %608 = vsyncadd %s600, 0
          %s609 = sadd.s32 %s30, %s29
          %s610 = smul.addr %s609, 4
          %s611 = scalar_lea.hbm %s9, %s610
          %s613 = sshll.u32 %s603, 4
          %s614 = int_to_ptr.vmem [resolvable:$true] %s613
          %s615 = sshll.u32 %s611, 4
          %s616 = int_to_ptr.hbm [resolvable:$true] %s615
          %618 = dma.vmem_to_hbm [thread:$0]  %s614, 64, %s616, %s600
        $region64: #{tpu_custom_call.1} parent=55 // pred_fallthru
          _
      $region56: #{tpu_custom_call.1} parent=5 // pred_fallthru
        _
      %p619 = scmp.le.s32.totalorder 2, %s20
      // Predicated region
      $region65: #{tpu_custom_call.1} parent=5 // pred_check
        %p620 = pneg %p619
      $region66: #{tpu_custom_call.1} parent=5 // pred_check_branch
        %622 = sbr.rel (%p620) target = $region68
      $region67: #{tpu_custom_call.1} parent=5 // pred_region
        %s623 = ssub.s32 %s20, 2
        // Predicated region
        $region69: #{tpu_custom_call.1} parent=67 // pred_check
          %p624 = pneg %p266
        $region70: #{tpu_custom_call.1} parent=67 // pred_check_branch
          %626 = sbr.rel (%p624) target = $region72
        $region71: #{tpu_custom_call.1} parent=67 // pred_region
          %s627 = sand.u32 %s251, 1
          %s628 = scalar_lea.sflag [#allocation5], %s627
          %s629 = sand.u32 %s251, 1
          %s630 = smul.addr %s629, 4
          %s631 = scalar_lea.vmem [#allocation6], %s630
          %633 = dma.done %s628, 64
        $region72: #{tpu_custom_call.1} parent=67 // pred_fallthru
          _
      $region68: #{tpu_custom_call.1} parent=5 // pred_fallthru
        _
    $region6: #{tpu_custom_call.1} parent=1 // loop_footer
      %s24 = sadd.s32 1, %s20
    $region7: #{tpu_custom_call.1} parent=1 // loop_footer_branch
      %19 = sbr.rel target = $region3
    $region8: #{tpu_custom_call.1} parent=1 // loop_exit
      _
    %634 = vsyncpa [#allocation4], 1
    %s635 = scalar_lea.sflag [#allocation4], 1
    %636 = vsyncpa %s635, 1
    %637 = vsyncpa [#allocation5], 1
    %s638 = scalar_lea.sflag [#allocation5], 1
    %639 = vsyncpa %s638, 1

</llo_original>
